<compile_context>
chip_gen: v7x
topology: tpu7x:2x2x1
jax: 0.10.0
libtpu: 0.0.40
codegen_flags: <defaults>
</compile_context>

<pallas_src>
import jax
import jax.numpy as jnp
from jax.experimental import pallas as pl
from jax.experimental.pallas import tpu as pltpu


def _round_up(v, m):
    return (v + m - 1) // m * m


def _graphsage_kernel(x_ref, w_enc_t_ref, w_cls_t_ref, out_ref):
    # x arrives as raw f32; cast to bf16 in-kernel (no separate host pad/cast pass).
    x = x_ref[...].astype(w_enc_t_ref.dtype)
    # Encoder hot path: h = relu(x @ W_enc^T), bf16 MXU inputs, f32 accumulation.
    h = jnp.dot(x, w_enc_t_ref[...], preferred_element_type=jnp.float32)
    h = jnp.maximum(h, 0.0)
    # Classifier: scores^T = h @ W_cls^T (narrow 8-lane class dim).
    out_ref[...] = jnp.dot(h.astype(w_cls_t_ref.dtype), w_cls_t_ref[...],
                           preferred_element_type=jnp.float32
                           ).astype(out_ref.dtype)


def prepare_graphsage_params(w_enc, w_cls, *, compute_dtype=jnp.bfloat16):
    """One-time parameter prep (hoisted out of the per-call path).

    w_enc: (E, F) Encoder.weight; w_cls: (C, E) SupervisedGraphSage.weight.
    Returns pre-transposed bf16 weights: (F, E) and (E, C padded to 8)."""
    e, f = w_enc.shape
    c, e2 = w_cls.shape
    assert e == e2
    # Tiny class dim: pad only to 8 lanes (16x less output DMA than a 128-lane slab).
    c_out = _round_up(c, 8)
    w_enc_t = jnp.asarray(w_enc.T, dtype=compute_dtype)                    # (F, E)
    w_cls_t = jnp.zeros((e, c_out), compute_dtype).at[:, :c].set(
        w_cls.T.astype(compute_dtype))                                     # (E, C8)
    return w_enc_t, w_cls_t


def _default_tile(n):
    # Big batches: large tiles to amortize the ~0.35us per-grid-step overhead.
    if n >= 4096:
        return 1024
    if n >= 1024:
        return 512
    # Small batches: split into 2 tiles so dual-TC chips (v7x) get both cores
    # busy; the one extra grid step is noise on single-TC v5e/v6e.
    return max(8, _round_up(pl.cdiv(n, 2), 8))


def supervised_graphsage_forward(x, w_enc_t, w_cls_t, num_classes, *, tm=None):
    """x: (N, F) f32 node features (already gathered); returns scores.t(), (N, C)."""
    n, f = x.shape
    f2, e = w_enc_t.shape
    e2, c_out = w_cls_t.shape
    assert f == f2 and e == e2 and num_classes <= c_out

    if tm is None:
        tm = _default_tile(n)
    tm = min(tm, _round_up(n, 8))
    grid = (pl.cdiv(n, tm),)

    flops = 2 * n * f * e + 2 * n * e * c_out
    bytes_accessed = (n * f * 4                              # x read once, f32
                      + (w_enc_t.size + w_cls_t.size) * 2    # bf16 weights
                      + n * c_out * 4)                       # narrow f32 output

    out = pl.pallas_call(
        _graphsage_kernel,
        out_shape=jax.ShapeDtypeStruct((n, c_out), jnp.float32),
        grid=grid,
        in_specs=[
            # x streamed per N-tile; full (unpadded) feature dim as the block.
            pl.BlockSpec((tm, f), lambda i: (i, 0)),
            # Tiny weights stay VMEM-resident across the whole grid.
            pl.BlockSpec((f, e), lambda i: (0, 0)),
            pl.BlockSpec((e, c_out), lambda i: (0, 0)),
        ],
        out_specs=pl.BlockSpec((tm, c_out), lambda i: (i, 0)),
        compiler_params=pltpu.CompilerParams(
            dimension_semantics=("parallel",),
            vmem_limit_bytes=48 * 1024 * 1024),
        cost_estimate=pl.CostEstimate(flops=flops, transcendentals=0,
                                      bytes_accessed=bytes_accessed),
    )(x, w_enc_t, w_cls_t)

    return out[:, :num_classes]


def _xavier_uniform(key, shape, dtype=jnp.float32):
    # torch.nn.init.xavier_uniform for a (fan_out, fan_in) weight matrix.
    fan_out, fan_in = shape
    bound = jnp.sqrt(6.0 / (fan_in + fan_out))
    return jax.random.uniform(key, shape, dtype, minval=-bound, maxval=bound)


if __name__ == "__main__":
    # Small Cora-like shapes: ragged N (exercises the masked tail tile and a
    # 2-wide parallel grid), full-dim F/E blocks, class dim padded 7 -> 8.
    num_nodes = 300      # batch of sampled nodes (tm=152, grid of 2 tiles)
    feat_dim = 192       # raw node-feature dimension (full-dim block, no pad)
    embed_dim = 64       # enc.embed_dim (full-dim block, no pad)
    num_classes = 7      # padded to 8 output lanes

    key = jax.random.PRNGKey(0)
    k_x, k_enc, k_cls = jax.random.split(key, 3)

    x = jax.random.normal(k_x, (num_nodes, feat_dim), dtype=jnp.float32)
    w_enc = _xavier_uniform(k_enc, (embed_dim, feat_dim))      # Encoder.weight
    w_cls = _xavier_uniform(k_cls, (num_classes, embed_dim))   # SupervisedGraphSage.weight

    # One-time parameter prep, kept device-resident alongside the params.
    w_enc_t, w_cls_t = jax.block_until_ready(
        prepare_graphsage_params(w_enc, w_cls))

    fwd = jax.jit(supervised_graphsage_forward,
                  static_argnames=("num_classes", "tm"))
    scores_t = fwd(x, w_enc_t, w_cls_t, num_classes=num_classes)
    jax.block_until_ready(scores_t)

    # Pure-JAX reference of the exact PyTorch math, mirroring the kernel's bf16
    # input rounding (accumulation stays f32 in both).
    xb = x.astype(jnp.bfloat16).astype(jnp.float32)
    web = w_enc.astype(jnp.bfloat16).astype(jnp.float32)
    wcb = w_cls.astype(jnp.bfloat16).astype(jnp.float32)
    h_ref = jnp.maximum(web @ xb.T, 0.0)                       # (embed_dim, N)
    h_ref = h_ref.astype(jnp.bfloat16).astype(jnp.float32)     # kernel casts h to bf16
    ref = (wcb @ h_ref).T                                      # (N, num_classes)

    assert scores_t.shape == (num_nodes, num_classes)
    max_err = float(jnp.max(jnp.abs(scores_t - ref)))
    assert jnp.allclose(scores_t, ref, atol=1e-2, rtol=1e-2), (
        "max abs err = %f" % max_err)

    print("KERNEL_OK")
</pallas_src>

<mosaic_0001>
module attributes {stable_mosaic.version = 11 : i64} {
  func.func @_graphsage_kernel(%arg0: i32, %arg1: memref<152x192xf32, #tpu.memory_space<vmem>>, %arg2: memref<192x64xbf16, #tpu.memory_space<vmem>>, %arg3: memref<64x8xbf16, #tpu.memory_space<vmem>>, %arg4: memref<152x8xf32, #tpu.memory_space<vmem>>) attributes {dimension_semantics = [#tpu.dimension_semantics<parallel>], iteration_bounds = array<i64: 2>, scalar_prefetch = 0 : i64, scratch_operands = 0 : i64, tpu.core_type = #tpu.core_type<tc>, window_params = [{transform_indices = @transform_0, window_bounds = array<i64: 152, 192>}, {pipeline_mode = #tpu.pipeline_mode<synchronous>, transform_indices = @transform_1, window_bounds = array<i64: 192, 64>}, {pipeline_mode = #tpu.pipeline_mode<synchronous>, transform_indices = @transform_2, window_bounds = array<i64: 64, 8>}, {transform_indices = @transform_3, window_bounds = array<i64: 152, 8>}]} {
    %c0 = arith.constant 0 : index
    %c0_0 = arith.constant 0 : index
    %0 = vector.load %arg1[%c0, %c0_0] : memref<152x192xf32, #tpu.memory_space<vmem>>, vector<152x192xf32>
    %1 = arith.truncf %0 : vector<152x192xf32> to vector<152x192xbf16>
    %c0_1 = arith.constant 0 : index
    %c0_2 = arith.constant 0 : index
    %2 = vector.load %arg2[%c0_1, %c0_2] : memref<192x64xbf16, #tpu.memory_space<vmem>>, vector<192x64xbf16>
    %cst = arith.constant dense<0.000000e+00> : vector<152x64xf32>
    %3 = tpu.matmul %1, %2, %cst {dimension_numbers = #tpu.dot_dimension_numbers<[1], [0], [0], [1], [0, 0, 1, 1], [], []>} : vector<152x192xbf16>, vector<192x64xbf16>, vector<152x64xf32> -> vector<152x64xf32>
    %cst_3 = arith.constant 0.000000e+00 : f32
    %4 = vector.broadcast %cst_3 : f32 to vector<152x64xf32>
    %5 = arith.maximumf %3, %4 : vector<152x64xf32>
    %6 = arith.truncf %5 : vector<152x64xf32> to vector<152x64xbf16>
    %c0_4 = arith.constant 0 : index
    %c0_5 = arith.constant 0 : index
    %7 = vector.load %arg3[%c0_4, %c0_5] : memref<64x8xbf16, #tpu.memory_space<vmem>>, vector<64x8xbf16>
    %cst_6 = arith.constant dense<0.000000e+00> : vector<152x8xf32>
    %8 = tpu.matmul %6, %7, %cst_6 {dimension_numbers = #tpu.dot_dimension_numbers<[1], [0], [0], [1], [0, 0, 1, 1], [], []>} : vector<152x64xbf16>, vector<64x8xbf16>, vector<152x8xf32> -> vector<152x8xf32>
    %c0_7 = arith.constant 0 : index
    %c0_8 = arith.constant 0 : index
    %9 = vector.load %arg4[%c0_7, %c0_8] : memref<152x8xf32, #tpu.memory_space<vmem>>, vector<152x8xf32>
    tpu.vector_store %arg4[%c0_7, %c0_8], %8 {strides = array<i32>} : memref<152x8xf32, #tpu.memory_space<vmem>>, vector<152x8xf32>,
    return
  }
  func.func @transform_0(%arg0: i32) -> (i32, i32) {
    %c0_i32 = arith.constant 0 : i32
    %c0_i32_0 = arith.constant 0 : i32
    return %arg0, %c0_i32 : i32, i32
  }
  func.func @transform_1(%arg0: i32) -> (i32, i32) {
    %c0_i32 = arith.constant 0 : i32
    %c0_i32_0 = arith.constant 0 : i32
    %c0_i32_1 = arith.constant 0 : i32
    return %c0_i32, %c0_i32_0 : i32, i32
  }
  func.func @transform_2(%arg0: i32) -> (i32, i32) {
    %c0_i32 = arith.constant 0 : i32
    %c0_i32_0 = arith.constant 0 : i32
    %c0_i32_1 = arith.constant 0 : i32
    return %c0_i32, %c0_i32_0 : i32, i32
  }
  func.func @transform_3(%arg0: i32) -> (i32, i32) {
    %c0_i32 = arith.constant 0 : i32
    %c0_i32_0 = arith.constant 0 : i32
    return %arg0, %c0_i32 : i32, i32
  }
}

</mosaic_0001>

<llo_original>
// kernel: supervised_graphsage_forward.1
$region0: #{supervised_graphsage_forward.1}
  #allocation0 [shape = 'u32[]', space=smem, size = 0x4, offset = 0x4, fixed_abs, tag = 'smem constant byte address 0x4 - core index']
  #allocation1 [shape = 'u32[144,128]{1,0:T(1,128)}', space=vmem, size = 0x12000, scoped, tag = 'internal scratch']
  %s0 = inlined_call_operand.vmem [shape: f32[300,192], index: 0, kind: input, shape index: {}]
  %s1 = inlined_call_operand.vmem [shape: bf16[192,64], index: 1, kind: input, shape index: {}]
  %s2 = inlined_call_operand.vmem [shape: bf16[64,8], index: 2, kind: input, shape index: {}]
  %s3 = inlined_call_operand.vmem [shape: f32[300,8], index: 3, kind: output, shape index: {}]
  %s4 = sld [smem:[#allocation0]]
  $region45: #{supervised_graphsage_forward.1} parent=0
    _
  %s6 = ssub.s32 1, %s4
  %s7 = scalar_select 0, %s6, %s4
  loop: start=0, step=1, limit=4
  $region2: #{supervised_graphsage_forward.1} parent=0 // loop_pre_header
    _
  $region3: #{supervised_graphsage_forward.1} parent=0 // loop_header
    %s9 = sphi 0, %s13
    %p10 = scmp.ge.s32.totalorder %s9, 4
    %s19 = sphi 0, %s21
    %s22 = sphi 0, %s19
    %s23 = sphi 0, %s22
    %s39 = sphi 0, %s23
    %s43 = sphi 0, %s43
    %s45 = sphi 0, %s43
    %s46 = sphi 0, %s45
    %s60 = sphi 0, %s46
    %s64 = sphi 0, %s64
    %s66 = sphi 0, %s64
    %s67 = sphi 0, %s66
    %s81 = sphi 0, %s67
    %s87 = sphi 0, %s89
    %s90 = sphi 0, %s87
    %s91 = sphi 0, %s90
    %s107 = sphi 0, %s91
  $region4: #{supervised_graphsage_forward.1} parent=0 // loop_header_branch
    %12 = sbr.rel (%p10) target = $region8
  $region5: #{supervised_graphsage_forward.1} parent=0 // loop_body
    %s14 = ssub.s32 %s9, 1
    %s15 = ssub.s32 %s9, 2
    %s16 = sadd.s32 %s9, 1
    %s17 = ssub.s32 %s9, %s16
    %p18 = scmp.eq.s32.totalorder %s17, 0
    %s20 = sadd.s32 %s19, 1
    %s21 = scalar_select %p18, %s19, %s20
    %p24 = pneg %p18
    %p25 = scmp.eq.s32.totalorder %s9, 1
    %p26 = por %p24, %p25
    %p27 = scmp.ne.s32.totalorder %s19, %s22
    %p28 = scmp.eq.s32.totalorder %s9, 0
    %p29 = por %p27, %p28
    %p30 = scmp.ne.s32.totalorder %s19, %s22
    %p31 = scmp.eq.s32.totalorder %s14, 1
    %p32 = por %p30, %p31
    %p33 = scmp.ne.s32.totalorder %s22, %s23
    %p34 = scmp.eq.s32.totalorder %s14, 0
    %p35 = por %p33, %p34
    %p36 = scmp.ne.s32.totalorder %s22, %s23
    %p37 = scmp.eq.s32.totalorder %s15, 1
    %p38 = por %p36, %p37
    %p40 = scmp.ne.s32.totalorder %s23, %s39
    %p41 = scmp.eq.s32.totalorder %s15, 0
    %p42 = por %p40, %p41
    %s44 = sadd.s32 %s43, 1
    %p47 = scmp.eq.s32.totalorder %s9, 1
    %p48 = scmp.ne.s32.totalorder %s43, %s45
    %p49 = scmp.eq.s32.totalorder %s9, 0
    %p50 = por %p48, %p49
    %p51 = scmp.ne.s32.totalorder %s43, %s45
    %p52 = scmp.eq.s32.totalorder %s14, 1
    %p53 = por %p51, %p52
    %p54 = scmp.ne.s32.totalorder %s45, %s46
    %p55 = scmp.eq.s32.totalorder %s14, 0
    %p56 = por %p54, %p55
    %p57 = scmp.ne.s32.totalorder %s45, %s46
    %p58 = scmp.eq.s32.totalorder %s15, 1
    %p59 = por %p57, %p58
    %p61 = scmp.ne.s32.totalorder %s46, %s60
    %p62 = scmp.eq.s32.totalorder %s15, 0
    %p63 = por %p61, %p62
    %s65 = sadd.s32 %s64, 1
    %p68 = scmp.eq.s32.totalorder %s9, 1
    %p69 = scmp.ne.s32.totalorder %s64, %s66
    %p70 = scmp.eq.s32.totalorder %s9, 0
    %p71 = por %p69, %p70
    %p72 = scmp.ne.s32.totalorder %s64, %s66
    %p73 = scmp.eq.s32.totalorder %s14, 1
    %p74 = por %p72, %p73
    %p75 = scmp.ne.s32.totalorder %s66, %s67
    %p76 = scmp.eq.s32.totalorder %s14, 0
    %p77 = por %p75, %p76
    %p78 = scmp.ne.s32.totalorder %s66, %s67
    %p79 = scmp.eq.s32.totalorder %s15, 1
    %p80 = por %p78, %p79
    %p82 = scmp.ne.s32.totalorder %s67, %s81
    %p83 = scmp.eq.s32.totalorder %s15, 0
    %p84 = por %p82, %p83
    %s85 = ssub.s32 %s9, %s16
    %p86 = scmp.eq.s32.totalorder %s85, 0
    %s88 = sadd.s32 %s87, 1
    %s89 = scalar_select %p86, %s87, %s88
    %p92 = pneg %p86
    %p93 = scmp.eq.s32.totalorder %s9, 1
    %p94 = por %p92, %p93
    %p95 = scmp.ne.s32.totalorder %s87, %s90
    %p96 = scmp.eq.s32.totalorder %s9, 0
    %p97 = por %p95, %p96
    %p98 = scmp.ne.s32.totalorder %s87, %s90
    %p99 = scmp.eq.s32.totalorder %s14, 1
    %p100 = por %p98, %p99
    %p101 = scmp.ne.s32.totalorder %s90, %s91
    %p102 = scmp.eq.s32.totalorder %s14, 0
    %p103 = por %p101, %p102
    %p104 = scmp.ne.s32.totalorder %s90, %s91
    %p105 = scmp.eq.s32.totalorder %s15, 1
    %p106 = por %p104, %p105
    %p108 = scmp.ne.s32.totalorder %s91, %s107
    %p109 = scmp.eq.s32.totalorder %s15, 0
    %p110 = por %p108, %p109
    %p111 = scmp.le.s32.totalorder 1, %s9
    %p112 = scmp.lt.s32.totalorder %s9, 3
    %p113 = pnand %p111, %p112
    %p114 = pneg %p113
    // Predicated region
    $region9: #{supervised_graphsage_forward.1} parent=5 // pred_check
      _
    $region10: #{supervised_graphsage_forward.1} parent=5 // pred_check_branch
      %116 = sbr.rel (%p113) target = $region12
    $region11: #{supervised_graphsage_forward.1} parent=5 // pred_region
      %s117 = ssub.s32 %s9, 1
      // Predicated region
      $region13: #{supervised_graphsage_forward.1} parent=11 // pred_check
        %p118 = pneg %p56
      $region14: #{supervised_graphsage_forward.1} parent=11 // pred_check_branch
        %120 = sbr.rel (%p118) target = $region16
      $region15: #{supervised_graphsage_forward.1} parent=11 // pred_region
        _
      $region16: #{supervised_graphsage_forward.1} parent=11 // pred_fallthru
        _
      // Predicated region
      $region17: #{supervised_graphsage_forward.1} parent=11 // pred_check
        %p121 = pneg %p77
      $region18: #{supervised_graphsage_forward.1} parent=11 // pred_check_branch
        %123 = sbr.rel (%p121) target = $region20
      $region19: #{supervised_graphsage_forward.1} parent=11 // pred_region
        _
      $region20: #{supervised_graphsage_forward.1} parent=11 // pred_fallthru
        _
    $region12: #{supervised_graphsage_forward.1} parent=5 // pred_fallthru
      _
    %p124 = scmp.lt.s32.totalorder %s9, 2
    // Predicated region
    $region21: #{supervised_graphsage_forward.1} parent=5 // pred_check
      %p125 = pneg %p124
    $region22: #{supervised_graphsage_forward.1} parent=5 // pred_check_branch
      %127 = sbr.rel (%p125) target = $region24
    $region23: #{supervised_graphsage_forward.1} parent=5 // pred_region
      // Predicated region
      $region25: #{supervised_graphsage_forward.1} parent=23 // pred_check
        %p128 = pneg %p29
      $region26: #{supervised_graphsage_forward.1} parent=23 // pred_check_branch
        %130 = sbr.rel (%p128) target = $region28
      $region27: #{supervised_graphsage_forward.1} parent=23 // pred_region
        %s131 = smul.u32 19, %s9
        %p132 = scmp.lt.s32.totalorder %s131, 37
        %s133 = scalar_select %p132, %s131, 37
        %s134 = smul.addr %s133, 2
        %s135 = smul.addr %s134, 8
        %s136 = scalar_lea.vmem %s0, %s135
        %s137 = smul.u32 19, %s9
      $region28: #{supervised_graphsage_forward.1} parent=23 // pred_fallthru
        _
    $region24: #{supervised_graphsage_forward.1} parent=5 // pred_fallthru
      _
    %p138 = scmp.le.s32.totalorder 1, %s9
    %p139 = scmp.lt.s32.totalorder %s9, 3
    %p140 = pnand %p138, %p139
    %p141 = pneg %p140
    // Predicated region
    $region29: #{supervised_graphsage_forward.1} parent=5 // pred_check
      _
    $region30: #{supervised_graphsage_forward.1} parent=5 // pred_check_branch
      %143 = sbr.rel (%p140) target = $region32
    $region31: #{supervised_graphsage_forward.1} parent=5 // pred_region
      %s144 = ssub.s32 %s9, 1
      %s145 = smul.u32 19, %s14
      %p146 = scmp.lt.s32.totalorder %s145, 37
      %s147 = scalar_select %p146, %s145, 37
      %s148 = smul.addr %s147, 2
      %s149 = smul.addr %s148, 8
      %s150 = scalar_lea.vmem %s0, %s149
      %p151 = pneg %p35
      %p152 = pneg %p32
      %p153 = pneg %p56
      %p154 = pneg %p53
      %p155 = pneg %p77
      %p156 = pneg %p74
      %p157 = pneg %p103
      %p158 = pneg %p100
      %s159 = smul.u32 19, %s14
      %p160 = scmp.lt.s32.totalorder %s159, 37
      %s161 = scalar_select %p160, %s159, 37
      %s162 = smul.addr %s161, 8
      %s163 = scalar_lea.vmem %s3, %s162
      %s164 = smul.u32 19, %s14
      %p165 = scmp.lt.s32.totalorder %s164, 37
      %s166 = scalar_select %p165, %s164, 37
      %s167 = smul.addr %s166, 2
      %s168 = smul.addr %s167, 8
      %s169 = scalar_lea.vmem %s0, %s168
      %s170 = smul.u32 19, %s14
      %s171 = smul.u32 19, %s14
      %p172 = scmp.lt.s32.totalorder %s171, 37
      %s173 = scalar_select %p172, %s171, 37
      %s174 = smul.addr %s173, 8
      %s175 = scalar_lea.vmem %s3, %s174
      %s176 = smul.u32 19, %s14
      %v178 = vld [vmem:[%s169] sm:$0xff]
      %v179 = vld [vmem:[%s169 + $0x8] sm:$0xff]
      %v180 = vld [vmem:[%s169 + $0x10] sm:$0xff]
      %v181 = vld [vmem:[%s169 + $0x18] sm:$0xff]
      %v182 = vld [vmem:[%s169 + $0x20] sm:$0xff]
      %v183 = vld [vmem:[%s169 + $0x28] sm:$0xff]
      %v184 = vld [vmem:[%s169 + $0x30] sm:$0xff]
      %v185 = vld [vmem:[%s169 + $0x38] sm:$0xff]
      %v186 = vld [vmem:[%s169 + $0x40] sm:$0xff]
      %v187 = vld [vmem:[%s169 + $0x48] sm:$0xff]
      %v188 = vld [vmem:[%s169 + $0x50] sm:$0xff]
      %v189 = vld [vmem:[%s169 + $0x58] sm:$0xff]
      %v190 = vld [vmem:[%s169 + $0x60] sm:$0xff]
      %v191 = vld [vmem:[%s169 + $0x68] sm:$0xff]
      %v192 = vld [vmem:[%s169 + $0x70] sm:$0xff]
      %v193 = vld [vmem:[%s169 + $0x78] sm:$0xff]
      %v194 = vld [vmem:[%s169 + $0x80] sm:$0xff]
      %v195 = vld [vmem:[%s169 + $0x88] sm:$0xff]
      %v196 = vld [vmem:[%s169 + $0x90] sm:$0xff]
      %v197 = vld [vmem:[%s169 + $0x98] sm:$0xff]
      %v198 = vld [vmem:[%s169 + $0xa0] sm:$0xff]
      %v199 = vld [vmem:[%s169 + $0xa8] sm:$0xff]
      %v200 = vld [vmem:[%s169 + $0xb0] sm:$0xff]
      %v201 = vld [vmem:[%s169 + $0xb8] sm:$0xff]
      %v202 = vld [vmem:[%s169 + $0xc0] sm:$0xff]
      %v203 = vld [vmem:[%s169 + $0xc8] sm:$0xff]
      %v204 = vld [vmem:[%s169 + $0xd0] sm:$0xff]
      %v205 = vld [vmem:[%s169 + $0xd8] sm:$0xff]
      %v206 = vld [vmem:[%s169 + $0xe0] sm:$0xff]
      %v207 = vld [vmem:[%s169 + $0xe8] sm:$0xff]
      %v208 = vld [vmem:[%s169 + $0xf0] sm:$0xff]
      %v209 = vld [vmem:[%s169 + $0xf8] sm:$0xff]
      %v210 = vld [vmem:[%s169 + $0x100] sm:$0xff]
      %v211 = vld [vmem:[%s169 + $0x108] sm:$0xff]
      %v212 = vld [vmem:[%s169 + $0x110] sm:$0xff]
      %v213 = vld [vmem:[%s169 + $0x118] sm:$0xff]
      %v214 = vld [vmem:[%s169 + $0x120] sm:$0xff]
      %v215 = vld [vmem:[%s169 + $0x128] sm:$0xff]
      %v216 = vpack.c.bf16 %v180, %v178
      %v217 = vpack.c.bf16 %v181, %v179
      %v218 = vpack.c.bf16 %v184, %v182
      %v219 = vpack.c.bf16 %v185, %v183
      %v220 = vpack.c.bf16 %v188, %v186
      %v221 = vpack.c.bf16 %v189, %v187
      %v222 = vpack.c.bf16 %v192, %v190
      %v223 = vpack.c.bf16 %v193, %v191
      %v224 = vpack.c.bf16 %v196, %v194
      %v225 = vpack.c.bf16 %v197, %v195
      %v226 = vpack.c.bf16 %v200, %v198
      %v227 = vpack.c.bf16 %v201, %v199
      %v228 = vpack.c.bf16 %v204, %v202
      %v229 = vpack.c.bf16 %v205, %v203
      %v230 = vpack.c.bf16 %v208, %v206
      %v231 = vpack.c.bf16 %v209, %v207
      %v232 = vpack.c.bf16 %v212, %v210
      %v233 = vpack.c.bf16 %v213, %v211
      %v234 = vpack.c.bf16 %v214, %v214
      %v235 = vpack.c.bf16 %v215, %v215
      %v236 = vld [vmem:[%s1] sm:$0xf]
      %v237 = vld [vmem:[%s1 + $0x4] sm:$0xf]
      %v238 = vld [vmem:[%s1 + $0x8] sm:$0xf]
      %v239 = vld [vmem:[%s1 + $0xc] sm:$0xf]
      %v240 = vld [vmem:[%s1 + $0x10] sm:$0xf]
      %v241 = vld [vmem:[%s1 + $0x14] sm:$0xf]
      %v242 = vld [vmem:[%s1 + $0x18] sm:$0xf]
      %v243 = vld [vmem:[%s1 + $0x1c] sm:$0xf]
      %v244 = vld [vmem:[%s1 + $0x20] sm:$0xf]
      %v245 = vld [vmem:[%s1 + $0x24] sm:$0xf]
      %v246 = vld [vmem:[%s1 + $0x28] sm:$0xf]
      %v247 = vld [vmem:[%s1 + $0x2c] sm:$0xf]
      %v248 = vld [vmem:[%s1 + $0x30] sm:$0xf]
      %v249 = vld [vmem:[%s1 + $0x34] sm:$0xf]
      %v250 = vld [vmem:[%s1 + $0x38] sm:$0xf]
      %v251 = vld [vmem:[%s1 + $0x3c] sm:$0xf]
      %v252 = vld [vmem:[%s1 + $0x40] sm:$0xf]
      %v253 = vld [vmem:[%s1 + $0x44] sm:$0xf]
      %v254 = vld [vmem:[%s1 + $0x48] sm:$0xf]
      %v255 = vld [vmem:[%s1 + $0x4c] sm:$0xf]
      %v256 = vld [vmem:[%s1 + $0x50] sm:$0xf]
      %v257 = vld [vmem:[%s1 + $0x54] sm:$0xf]
      %v258 = vld [vmem:[%s1 + $0x58] sm:$0xf]
      %v259 = vld [vmem:[%s1 + $0x5c] sm:$0xf]
      %v284 = vunpack.c.l.b16 %v236
      %v285 = vunpack.c.l.b16 %v237
      %v286 = vunpack.c.l.b16 %v238
      %v287 = vunpack.c.l.b16 %v239
      %v288 = vunpack.c.l.b16 %v240
      %v289 = vunpack.c.l.b16 %v241
      %v290 = vunpack.c.l.b16 %v242
      %v291 = vunpack.c.l.b16 %v243
      %v292 = vunpack.c.l.b16 %v244
      %v293 = vunpack.c.l.b16 %v245
      %v294 = vunpack.c.l.b16 %v246
      %v295 = vunpack.c.l.b16 %v247
      %v296 = vunpack.c.l.b16 %v248
      %v297 = vunpack.c.l.b16 %v249
      %v298 = vunpack.c.l.b16 %v250
      %v299 = vunpack.c.l.b16 %v251
      %v300 = vunpack.c.l.b16 %v252
      %v301 = vunpack.c.l.b16 %v253
      %v302 = vunpack.c.l.b16 %v254
      %v303 = vunpack.c.l.b16 %v255
      %v304 = vunpack.c.l.b16 %v256
      %v305 = vunpack.c.l.b16 %v257
      %v306 = vunpack.c.l.b16 %v258
      %v307 = vunpack.c.l.b16 %v259
      %v308 = vpack.c.b16 %v285, %v284
      %v309 = vpack.c.b16 %v287, %v286
      %v310 = vpack.c.b16 %v289, %v288
      %v311 = vpack.c.b16 %v291, %v290
      %v312 = vpack.c.b16 %v293, %v292
      %v313 = vpack.c.b16 %v295, %v294
      %v314 = vpack.c.b16 %v297, %v296
      %v315 = vpack.c.b16 %v299, %v298
      %v316 = vpack.c.b16 %v301, %v300
      %v317 = vpack.c.b16 %v303, %v302
      %v318 = vpack.c.b16 %v305, %v304
      %v319 = vpack.c.b16 %v307, %v306
      %vm332 = vcmask 523264
      %v334 = vsel %vm332, %v217, 0
      %v337 = vsel %vm332, %v219, 0
      %v340 = vsel %vm332, %v221, 0
      %v343 = vsel %vm332, %v223, 0
      %v346 = vsel %vm332, %v225, 0
      %v349 = vsel %vm332, %v227, 0
      %v352 = vsel %vm332, %v229, 0
      %v355 = vsel %vm332, %v231, 0
      %v358 = vsel %vm332, %v233, 0
      %v361 = vsel %vm332, %v235, 0
      %363 = vmatprep.subr.bf16.mxu0 0
      %364 = vmatpush1.bf16.msra.mxu0 %v308
      %365 = vmatprep.subr.bf16.mxu0 0
      %366 = vmatpush1.bf16.msra.mxu0 %v309
      %367 = vmatprep.subr.bf16.mxu0 0
      %368 = vmatpush1.bf16.msra.mxu0 %v310
      %369 = vmatprep.subr.bf16.mxu0 0
      %370 = vmatpush1.bf16.msra.mxu0 %v311
      %371 = vmatprep.subr.bf16.mxu0 0
      %372 = vmatpush1.bf16.msra.mxu0 %v312
      %373 = vmatprep.subr.bf16.mxu0 0
      %374 = vmatpush1.bf16.msra.mxu0 %v313
      %375 = vmatprep.subr.bf16.mxu0 0
      %376 = vmatpush1.bf16.msra.mxu0 %v314
      %377 = vmatprep.subr.bf16.mxu0 0
      %378 = vmatpush1.bf16.msra.mxu0 %v315
      %379 = vmatprep.subr.bf16.mxu0 0
      %380 = vmatpush1.bf16.msra.mxu0 %v316
      %381 = vmatprep.subr.bf16.mxu0 0
      %382 = vmatpush1.bf16.msra.mxu0 %v317
      %383 = vmatprep.subr.bf16.mxu0 0
      %384 = vmatpush1.bf16.msra.mxu0 %v318
      %385 = vmatprep.subr.bf16.mxu0 0
      %386 = vmatpush1.bf16.msra.mxu0 %v319
      %387 = vmatprep.subr.bf16.mxu0 0
      %388 = vmatpush1.bf16.msra.mxu0 0
      %389 = vmatprep.subr.bf16.mxu0 0
      %390 = vmatpush1.bf16.msra.mxu0 0
      %391 = vmatprep.subr.bf16.mxu0 0
      %392 = vmatpush1.bf16.msra.mxu0 0
      %393 = vmatprep.subr.bf16.mxu0 0
      %394 = vmatpush1.bf16.msra.mxu0 0
      %395 = vmatprep.mubr.bf16.mxu0 %v334
      %396 = vmatmul.mubr.bf16.gmra.mrb[0].mxu0 %v216
      %v397 = vpop.f32.mrb[0].mxu0
      %v398 = vadd.f32 0.0, %v397
      %v399 = vpop.f32.mrb[0].mxu0
      %v400 = vpop.f32.mrb[0].mxu0
      %v401 = vadd.f32 0.0, %v400
      %v402 = vpop.f32.mrb[0].mxu0
      %403 = vmatprep.mubr.bf16.mxu0 %v337
      %404 = vmatmul.mubr.bf16.gmra.mrb[0].mxu0 %v218
      %v405 = vpop.f32.mrb[0].mxu0
      %v406 = vadd.f32 0.0, %v405
      %v407 = vpop.f32.mrb[0].mxu0
      %v408 = vpop.f32.mrb[0].mxu0
      %v409 = vadd.f32 0.0, %v408
      %v410 = vpop.f32.mrb[0].mxu0
      %411 = vmatprep.mubr.bf16.mxu0 %v340
      %412 = vmatmul.mubr.bf16.gmra.mrb[0].mxu0 %v220
      %v413 = vpop.f32.mrb[0].mxu0
      %v414 = vadd.f32 0.0, %v413
      %v415 = vpop.f32.mrb[0].mxu0
      %v416 = vpop.f32.mrb[0].mxu0
      %v417 = vadd.f32 0.0, %v416
      %v418 = vpop.f32.mrb[0].mxu0
      %419 = vmatprep.mubr.bf16.mxu0 %v343
      %420 = vmatmul.mubr.bf16.gmra.mrb[0].mxu0 %v222
      %v421 = vpop.f32.mrb[0].mxu0
      %v422 = vadd.f32 0.0, %v421
      %v423 = vpop.f32.mrb[0].mxu0
      %v424 = vpop.f32.mrb[0].mxu0
      %v425 = vadd.f32 0.0, %v424
      %v426 = vpop.f32.mrb[0].mxu0
      %427 = vmatprep.mubr.bf16.mxu0 %v346
      %428 = vmatmul.mubr.bf16.gmra.mrb[0].mxu0 %v224
      %v429 = vpop.f32.mrb[0].mxu0
      %v430 = vadd.f32 0.0, %v429
      %v431 = vpop.f32.mrb[0].mxu0
      %v432 = vpop.f32.mrb[0].mxu0
      %v433 = vadd.f32 0.0, %v432
      %v434 = vpop.f32.mrb[0].mxu0
      %435 = vmatprep.mubr.bf16.mxu0 %v349
      %436 = vmatmul.mubr.bf16.gmra.mrb[0].mxu0 %v226
      %v437 = vpop.f32.mrb[0].mxu0
      %v438 = vadd.f32 0.0, %v437
      %v439 = vpop.f32.mrb[0].mxu0
      %v440 = vpop.f32.mrb[0].mxu0
      %v441 = vadd.f32 0.0, %v440
      %v442 = vpop.f32.mrb[0].mxu0
      %443 = vmatprep.mubr.bf16.mxu0 %v352
      %444 = vmatmul.mubr.bf16.gmra.mrb[0].mxu0 %v228
      %v445 = vpop.f32.mrb[0].mxu0
      %v446 = vadd.f32 0.0, %v445
      %v447 = vpop.f32.mrb[0].mxu0
      %v448 = vpop.f32.mrb[0].mxu0
      %v449 = vadd.f32 0.0, %v448
      %v450 = vpop.f32.mrb[0].mxu0
      %451 = vmatprep.mubr.bf16.mxu0 %v355
      %452 = vmatmul.mubr.bf16.gmra.mrb[0].mxu0 %v230
      %v453 = vpop.f32.mrb[0].mxu0
      %v454 = vadd.f32 0.0, %v453
      %v455 = vpop.f32.mrb[0].mxu0
      %v456 = vpop.f32.mrb[0].mxu0
      %v457 = vadd.f32 0.0, %v456
      %v458 = vpop.f32.mrb[0].mxu0
      %459 = vmatprep.mubr.bf16.mxu0 %v358
      %460 = vmatmul.mubr.bf16.gmra.mrb[0].mxu0 %v232
      %v461 = vpop.f32.mrb[0].mxu0
      %v462 = vadd.f32 0.0, %v461
      %v463 = vpop.f32.mrb[0].mxu0
      %v464 = vpop.f32.mrb[0].mxu0
      %v465 = vadd.f32 0.0, %v464
      %v466 = vpop.f32.mrb[0].mxu0
      %467 = vmatprep.mubr.bf16.mxu0 %v361
      %468 = vmatmul.mubr.bf16.gmra.mrb[0].mxu0 %v234
      %v469 = vpop.f32.mrb[0].mxu0
      %v470 = vadd.f32 0.0, %v469
      %v471 = vpop.f32.mrb[0].mxu0
      %v472 = vpop.f32.mrb[0].mxu0
      %v473 = vpop.f32.mrb[0].mxu0
      %474 = vdwg.mxu0
      %v475 = vmax.f32 %v398, 0.0
      %v476 = vmax.f32 %v401, 0.0
      %v477 = vmax.f32 %v406, 0.0
      %v478 = vmax.f32 %v409, 0.0
      %v479 = vmax.f32 %v414, 0.0
      %v480 = vmax.f32 %v417, 0.0
      %v481 = vmax.f32 %v422, 0.0
      %v482 = vmax.f32 %v425, 0.0
      %v483 = vmax.f32 %v430, 0.0
      %v484 = vmax.f32 %v433, 0.0
      %v485 = vmax.f32 %v438, 0.0
      %v486 = vmax.f32 %v441, 0.0
      %v487 = vmax.f32 %v446, 0.0
      %v488 = vmax.f32 %v449, 0.0
      %v489 = vmax.f32 %v454, 0.0
      %v490 = vmax.f32 %v457, 0.0
      %v491 = vmax.f32 %v462, 0.0
      %v492 = vmax.f32 %v465, 0.0
      %v493 = vmax.f32 %v470, 0.0
      %v494 = vpack.c.bf16 %v476, %v475
      %v495 = vpack.c.bf16 %v478, %v477
      %v496 = vpack.c.bf16 %v480, %v479
      %v497 = vpack.c.bf16 %v482, %v481
      %v498 = vpack.c.bf16 %v484, %v483
      %v499 = vpack.c.bf16 %v486, %v485
      %v500 = vpack.c.bf16 %v488, %v487
      %v501 = vpack.c.bf16 %v490, %v489
      %v502 = vpack.c.bf16 %v492, %v491
      %v503 = vpack.c.bf16 %v493, %v493
      %v504 = vld [vmem:[%s2] sm:$0xf]
      %v505 = vld [vmem:[%s2 + $0x4] sm:$0xf]
      %v506 = vld [vmem:[%s2 + $0x8] sm:$0xf]
      %v507 = vld [vmem:[%s2 + $0xc] sm:$0xf]
      %v508 = vld [vmem:[%s2 + $0x10] sm:$0xf]
      %v509 = vld [vmem:[%s2 + $0x14] sm:$0xf]
      %v510 = vld [vmem:[%s2 + $0x18] sm:$0xf]
      %v511 = vld [vmem:[%s2 + $0x1c] sm:$0xf]
      %v520 = vunpack.c.l.b16 %v504
      %v521 = vunpack.c.l.b16 %v505
      %v522 = vunpack.c.l.b16 %v506
      %v523 = vunpack.c.l.b16 %v507
      %v524 = vunpack.c.l.b16 %v508
      %v525 = vunpack.c.l.b16 %v509
      %v526 = vunpack.c.l.b16 %v510
      %v527 = vunpack.c.l.b16 %v511
      %v528 = vpack.c.b16 %v521, %v520
      %v529 = vpack.c.b16 %v523, %v522
      %v530 = vpack.c.b16 %v525, %v524
      %v531 = vpack.c.b16 %v527, %v526
      %v537 = vsel %vm332, %v494, 0
      %v540 = vsel %vm332, %v495, 0
      %v543 = vsel %vm332, %v496, 0
      %v546 = vsel %vm332, %v497, 0
      %v549 = vsel %vm332, %v498, 0
      %v552 = vsel %vm332, %v499, 0
      %v555 = vsel %vm332, %v500, 0
      %v558 = vsel %vm332, %v501, 0
      %v561 = vsel %vm332, %v502, 0
      %v564 = vsel %vm332, %v503, 0
      %566 = vmatprep.subr.bf16.mxu0 0
      %567 = vmatpush1.bf16.msra.mxu0 %v528
      %568 = vmatprep.subr.bf16.mxu0 0
      %569 = vmatpush1.bf16.msra.mxu0 %v529
      %570 = vmatprep.subr.bf16.mxu0 0
      %571 = vmatpush1.bf16.msra.mxu0 %v530
      %572 = vmatprep.subr.bf16.mxu0 0
      %573 = vmatpush1.bf16.msra.mxu0 %v531
      %574 = vmatprep.subr.bf16.mxu0 0
      %575 = vmatpush1.bf16.msra.mxu0 0
      %576 = vmatprep.subr.bf16.mxu0 0
      %577 = vmatpush1.bf16.msra.mxu0 0
      %578 = vmatprep.subr.bf16.mxu0 0
      %579 = vmatpush1.bf16.msra.mxu0 0
      %580 = vmatprep.subr.bf16.mxu0 0
      %581 = vmatpush1.bf16.msra.mxu0 0
      %582 = vmatprep.subr.bf16.mxu0 0
      %583 = vmatpush1.bf16.msra.mxu0 0
      %584 = vmatprep.subr.bf16.mxu0 0
      %585 = vmatpush1.bf16.msra.mxu0 0
      %586 = vmatprep.subr.bf16.mxu0 0
      %587 = vmatpush1.bf16.msra.mxu0 0
      %588 = vmatprep.subr.bf16.mxu0 0
      %589 = vmatpush1.bf16.msra.mxu0 0
      %590 = vmatprep.subr.bf16.mxu0 0
      %591 = vmatpush1.bf16.msra.mxu0 0
      %592 = vmatprep.subr.bf16.mxu0 0
      %593 = vmatpush1.bf16.msra.mxu0 0
      %594 = vmatprep.subr.bf16.mxu0 0
      %595 = vmatpush1.bf16.msra.mxu0 0
      %596 = vmatprep.subr.bf16.mxu0 0
      %597 = vmatpush1.bf16.msra.mxu0 0
      %598 = vmatprep.mubr.bf16.mxu0 0
      %599 = vmatmul.mubr.bf16.gmra.mrb[0].mxu0 %v537
      %v600 = vpop.f32.mrb[0].mxu0
      %v601 = vadd.f32 0.0, %v600
      %v602 = vpop.f32.mrb[0].mxu0
      %v603 = vpop.f32.mrb[0].mxu0
      %v604 = vadd.f32 0.0, %v603
      %v605 = vpop.f32.mrb[0].mxu0
      %606 = vmatprep.mubr.bf16.mxu0 0
      %607 = vmatmul.mubr.bf16.gmra.mrb[0].mxu0 %v540
      %v608 = vpop.f32.mrb[0].mxu0
      %v609 = vadd.f32 0.0, %v608
      %v610 = vpop.f32.mrb[0].mxu0
      %v611 = vpop.f32.mrb[0].mxu0
      %v612 = vadd.f32 0.0, %v611
      %v613 = vpop.f32.mrb[0].mxu0
      %614 = vmatprep.mubr.bf16.mxu0 0
      %615 = vmatmul.mubr.bf16.gmra.mrb[0].mxu0 %v543
      %v616 = vpop.f32.mrb[0].mxu0
      %v617 = vadd.f32 0.0, %v616
      %v618 = vpop.f32.mrb[0].mxu0
      %v619 = vpop.f32.mrb[0].mxu0
      %v620 = vadd.f32 0.0, %v619
      %v621 = vpop.f32.mrb[0].mxu0
      %622 = vmatprep.mubr.bf16.mxu0 0
      %623 = vmatmul.mubr.bf16.gmra.mrb[0].mxu0 %v546
      %v624 = vpop.f32.mrb[0].mxu0
      %v625 = vadd.f32 0.0, %v624
      %v626 = vpop.f32.mrb[0].mxu0
      %v627 = vpop.f32.mrb[0].mxu0
      %v628 = vadd.f32 0.0, %v627
      %v629 = vpop.f32.mrb[0].mxu0
      %630 = vmatprep.mubr.bf16.mxu0 0
      %631 = vmatmul.mubr.bf16.gmra.mrb[0].mxu0 %v549
      %v632 = vpop.f32.mrb[0].mxu0
      %v633 = vadd.f32 0.0, %v632
      %v634 = vpop.f32.mrb[0].mxu0
      %v635 = vpop.f32.mrb[0].mxu0
      %v636 = vadd.f32 0.0, %v635
      %v637 = vpop.f32.mrb[0].mxu0
      %638 = vmatprep.mubr.bf16.mxu0 0
      %639 = vmatmul.mubr.bf16.gmra.mrb[0].mxu0 %v552
      %v640 = vpop.f32.mrb[0].mxu0
      %v641 = vadd.f32 0.0, %v640
      %v642 = vpop.f32.mrb[0].mxu0
      %v643 = vpop.f32.mrb[0].mxu0
      %v644 = vadd.f32 0.0, %v643
      %v645 = vpop.f32.mrb[0].mxu0
      %646 = vmatprep.mubr.bf16.mxu0 0
      %647 = vmatmul.mubr.bf16.gmra.mrb[0].mxu0 %v555
      %v648 = vpop.f32.mrb[0].mxu0
      %v649 = vadd.f32 0.0, %v648
      %v650 = vpop.f32.mrb[0].mxu0
      %v651 = vpop.f32.mrb[0].mxu0
      %v652 = vadd.f32 0.0, %v651
      %v653 = vpop.f32.mrb[0].mxu0
      %654 = vmatprep.mubr.bf16.mxu0 0
      %655 = vmatmul.mubr.bf16.gmra.mrb[0].mxu0 %v558
      %v656 = vpop.f32.mrb[0].mxu0
      %v657 = vadd.f32 0.0, %v656
      %v658 = vpop.f32.mrb[0].mxu0
      %v659 = vpop.f32.mrb[0].mxu0
      %v660 = vadd.f32 0.0, %v659
      %v661 = vpop.f32.mrb[0].mxu0
      %662 = vmatprep.mubr.bf16.mxu0 0
      %663 = vmatmul.mubr.bf16.gmra.mrb[0].mxu0 %v561
      %v664 = vpop.f32.mrb[0].mxu0
      %v665 = vadd.f32 0.0, %v664
      %v666 = vpop.f32.mrb[0].mxu0
      %v667 = vpop.f32.mrb[0].mxu0
      %v668 = vadd.f32 0.0, %v667
      %v669 = vpop.f32.mrb[0].mxu0
      %670 = vmatprep.mubr.bf16.mxu0 0
      %671 = vmatmul.mubr.bf16.gmra.mrb[0].mxu0 %v564
      %v672 = vpop.f32.mrb[0].mxu0
      %v673 = vadd.f32 0.0, %v672
      %v674 = vpop.f32.mrb[0].mxu0
      %v675 = vpop.f32.mrb[0].mxu0
      %v676 = vpop.f32.mrb[0].mxu0
      %677 = vdwg.mxu0
      %vm678 = vcmask 64512
      %679 = vst.msk [vmem:[%s175] sm:$0xff] %vm678, %v601
      %680 = vst.msk [vmem:[%s175 + $0x8] sm:$0xff] %vm678, %v604
      %681 = vst.msk [vmem:[%s175 + $0x10] sm:$0xff] %vm678, %v609
      %682 = vst.msk [vmem:[%s175 + $0x18] sm:$0xff] %vm678, %v612
      %683 = vst.msk [vmem:[%s175 + $0x20] sm:$0xff] %vm678, %v617
      %684 = vst.msk [vmem:[%s175 + $0x28] sm:$0xff] %vm678, %v620
      %685 = vst.msk [vmem:[%s175 + $0x30] sm:$0xff] %vm678, %v625
      %686 = vst.msk [vmem:[%s175 + $0x38] sm:$0xff] %vm678, %v628
      %687 = vst.msk [vmem:[%s175 + $0x40] sm:$0xff] %vm678, %v633
      %688 = vst.msk [vmem:[%s175 + $0x48] sm:$0xff] %vm678, %v636
      %689 = vst.msk [vmem:[%s175 + $0x50] sm:$0xff] %vm678, %v641
      %690 = vst.msk [vmem:[%s175 + $0x58] sm:$0xff] %vm678, %v644
      %691 = vst.msk [vmem:[%s175 + $0x60] sm:$0xff] %vm678, %v649
      %692 = vst.msk [vmem:[%s175 + $0x68] sm:$0xff] %vm678, %v652
      %693 = vst.msk [vmem:[%s175 + $0x70] sm:$0xff] %vm678, %v657
      %694 = vst.msk [vmem:[%s175 + $0x78] sm:$0xff] %vm678, %v660
      %695 = vst.msk [vmem:[%s175 + $0x80] sm:$0xff] %vm678, %v665
      %696 = vst.msk [vmem:[%s175 + $0x88] sm:$0xff] %vm678, %v668
      %697 = vst.msk [vmem:[%s175 + $0x90] sm:$0xff] %vm678, %v673
      %s698 = smul.u32 19, %s14
      %p699 = scmp.lt.s32.totalorder %s698, 37
      %s700 = scalar_select %p699, %s698, 37
      %s701 = smul.addr %s700, 8
      %s702 = scalar_lea.vmem %s3, %s701
      // Predicated region
      $region33: #{supervised_graphsage_forward.1} parent=31 // pred_check
        %p703 = pneg %p100
      $region34: #{supervised_graphsage_forward.1} parent=31 // pred_check_branch
        %705 = sbr.rel (%p703) target = $region36
      $region35: #{supervised_graphsage_forward.1} parent=31 // pred_region
        %s706 = smul.u32 19, %s14
      $region36: #{supervised_graphsage_forward.1} parent=31 // pred_fallthru
        _
    $region32: #{supervised_graphsage_forward.1} parent=5 // pred_fallthru
      _
    %p707 = scmp.le.s32.totalorder 2, %s9
    // Predicated region
    $region37: #{supervised_graphsage_forward.1} parent=5 // pred_check
      %p708 = pneg %p707
    $region38: #{supervised_graphsage_forward.1} parent=5 // pred_check_branch
      %710 = sbr.rel (%p708) target = $region40
    $region39: #{supervised_graphsage_forward.1} parent=5 // pred_region
      %s711 = ssub.s32 %s9, 2
      // Predicated region
      $region41: #{supervised_graphsage_forward.1} parent=39 // pred_check
        %p712 = pneg %p106
      $region42: #{supervised_graphsage_forward.1} parent=39 // pred_check_branch
        %714 = sbr.rel (%p712) target = $region44
      $region43: #{supervised_graphsage_forward.1} parent=39 // pred_region
        %s715 = smul.u32 19, %s15
        %p716 = scmp.lt.s32.totalorder %s715, 37
        %s717 = scalar_select %p716, %s715, 37
        %s718 = smul.addr %s717, 8
        %s719 = scalar_lea.vmem %s3, %s718
      $region44: #{supervised_graphsage_forward.1} parent=39 // pred_fallthru
        _
    $region40: #{supervised_graphsage_forward.1} parent=5 // pred_fallthru
      _
  $region6: #{supervised_graphsage_forward.1} parent=0 // loop_footer
    %s13 = sadd.s32 1, %s9
  $region7: #{supervised_graphsage_forward.1} parent=0 // loop_footer_branch
    %8 = sbr.rel target = $region3
  $region8: #{supervised_graphsage_forward.1} parent=0 // loop_exit
    _

</llo_original>
